<compile_context>
chip_gen: v7x
topology: tpu7x:2x2x1
jax: 0.10.0
libtpu: 0.0.40
codegen_flags: <defaults>
</compile_context>

<pallas_src>
import functools

import jax
import jax.numpy as jnp
from jax.experimental import pallas as pl
from jax.experimental.pallas import tpu as pltpu


_LANES = 128
_MAX_TILE_BYTES = 8 * 1024 * 1024        # per-array per-block cap (8 MiB)
_FALLBACK_VMEM_CAP = 64 * 1024 * 1024    # if get_tpu_info() is unavailable
_MIN_GRID_STEPS = 4                      # let both v7x TensorCores stream


def _sublane_multiple(dtype) -> int:
    itemsize = jnp.dtype(dtype).itemsize
    if itemsize >= 4:
        return 8
    if itemsize == 2:
        return 16
    return 32


def _vmem_capacity_bytes() -> int:
    try:
        return int(pltpu.get_tpu_info().vmem_capacity_bytes)
    except Exception:  # pragma: no cover - conservative fallback
        return _FALLBACK_VMEM_CAP


def _mish_kernel(x_ref, o_ref, *, use_newton: bool):
    # Compute in f32 (exact for f32 inputs; bf16 inputs upcast for accuracy).
    xf = x_ref[...].astype(jnp.float32)
    # tanh(softplus(x)) = e*(e+2) / (e*(e+2) + 2), e = exp(x).  Clamp at 20
    # (PyTorch softplus threshold) so exp never overflows; for x > 20,
    # mish(x) == x (tanh(softplus(x)) rounds to 1 in f32).
    e = jnp.exp(jnp.minimum(xf, 20.0))
    num = e * (e + 2.0)
    den = num + 2.0
    inv = pl.reciprocal(den, approx=True)        # EUP slot, cheap
    if use_newton:
        inv = inv * (2.0 - den * inv)            # VPU-only Newton step -> ~f32 exact
    y = jnp.where(xf > 20.0, xf, xf * (num * inv))
    o_ref[...] = y.astype(o_ref.dtype)


def _mish_jnp(x):
    # Plain-JAX Mish with PyTorch softplus semantics (threshold 20); used only
    # for tiny non-lane-aligned tails.
    xf = x.astype(jnp.float32)
    sp = jnp.where(xf > 20.0, xf, jnp.log1p(jnp.exp(jnp.minimum(xf, 20.0))))
    return (xf * jnp.tanh(sp)).astype(x.dtype)


def _mish_2d(x2d: jax.Array, *, target_tile_bytes=None) -> jax.Array:
    rows, width = x2d.shape
    dtype = x2d.dtype
    itemsize = jnp.dtype(dtype).itemsize
    sub = _sublane_multiple(dtype)

    vmem_cap = _vmem_capacity_bytes()
    if target_tile_bytes is None:
        # ~capacity/8: one input + one output, each double-buffered, plus headroom.
        target_tile_bytes = min(_MAX_TILE_BYTES, vmem_cap // 8)

    block_rows = max(sub, target_tile_bytes // (width * itemsize))
    block_rows = max(sub, (block_rows // sub) * sub)       # dtype-aware sublane align

    # Keep the grid at >= _MIN_GRID_STEPS steps for large inputs so the
    # "parallel" axis can shard across v7x's two TensorCores.
    if rows >= _MIN_GRID_STEPS * sub:
        cap = (rows + _MIN_GRID_STEPS - 1) // _MIN_GRID_STEPS
        cap = max(sub, (cap // sub) * sub)
        block_rows = min(block_rows, cap)
    block_rows = min(block_rows, rows)                     # full dim is always legal

    grid = (pl.cdiv(rows, block_rows),)                    # ragged edge block: Pallas masks

    tile_bytes = block_rows * width * itemsize
    # Scoped VMEM: 2 arrays x 2 buffers x tile + headroom; well under physical
    # capacity (64 MiB/TC on v7x, 128 MiB on v5e/v6e).
    vmem_limit = min(int(vmem_cap * 0.75), 4 * tile_bytes + 8 * 1024 * 1024)
    vmem_limit = max(vmem_limit, 4 * tile_bytes + 1024 * 1024)

    n = rows * width
    cost = pl.CostEstimate(
        flops=10 * n,
        transcendentals=2 * n,
        bytes_accessed=2 * n * itemsize,
    )

    # Approx-reciprocal error (~2^-12 rel) is invisible in bf16/fp8 outputs.
    use_newton = itemsize >= 4

    return pl.pallas_call(
        functools.partial(_mish_kernel, use_newton=use_newton),
        out_shape=jax.ShapeDtypeStruct((rows, width), dtype),
        grid_spec=pltpu.PrefetchScalarGridSpec(
            num_scalar_prefetch=0,
            grid=grid,
            in_specs=[pl.BlockSpec((block_rows, width), lambda i: (i, 0))],
            out_specs=pl.BlockSpec((block_rows, width), lambda i: (i, 0)),
        ),
        compiler_params=pltpu.CompilerParams(
            dimension_semantics=("parallel",),
            vmem_limit_bytes=int(vmem_limit),
        ),
        cost_estimate=cost,
    )(x2d)


def mish(x: jax.Array, *, target_tile_bytes=None) -> jax.Array:
    """Elementwise Mish. Accepts any shape (e.g. NCHW); returns same shape/dtype."""
    orig_shape = x.shape
    total = x.size
    if total == 0:
        return x

    # Lane-dense width: largest multiple of 128 (<= 8192) that divides `total`.
    width = 0
    for cand in (8192, 4096, 2048, 1024, 512, 256, 128):
        if total % cand == 0:
            width = cand
            break

    if width:
        out2d = _mish_2d(x.reshape(total // width, width),
                         target_tile_bytes=target_tile_bytes)
        return out2d.reshape(orig_shape)

    # Element count not lane-divisible: run the kernel on the 128-aligned
    # prefix and finish the <128-element tail with plain jnp (no padded
    # full-array HBM round trips).
    flat = jnp.ravel(x)
    aligned = (total // _LANES) * _LANES
    if aligned == 0:
        return _mish_jnp(flat).reshape(orig_shape)
    head = _mish_2d(flat[:aligned].reshape(aligned // _LANES, _LANES),
                    target_tile_bytes=target_tile_bytes)
    tail = _mish_jnp(flat[aligned:])
    return jnp.concatenate([head.reshape(-1), tail]).reshape(orig_shape)


def _mish_ref(x):
    # Direct PyTorch-semantics reference: x * tanh(softplus(x)), threshold 20.
    xf = x.astype(jnp.float32)
    sp = jnp.where(xf > 20.0, xf, jnp.log1p(jnp.exp(jnp.minimum(xf, 20.0))))
    return (xf * jnp.tanh(sp)).astype(x.dtype)


if __name__ == "__main__":
    key = jax.random.PRNGKey(0)

    # Module has no parameters; NCHW input like a conv-net feature map.
    x = jax.random.normal(key, (2, 4, 16, 16), dtype=jnp.float32) * 3.0
    y = jax.block_until_ready(mish(x))
    y_ref = _mish_ref(x)
    assert y.shape == x.shape and y.dtype == x.dtype
    assert jnp.allclose(y, y_ref, atol=1e-3, rtol=1e-3), "mismatch vs reference (main)"

    # Ragged element count (not 128-divisible) -> kernel prefix + jnp tail path.
    x2 = jax.random.normal(jax.random.PRNGKey(1), (2, 3, 129), dtype=jnp.float32) * 3.0
    y2 = jax.block_until_ready(mish(x2))
    assert y2.shape == x2.shape and y2.dtype == x2.dtype
    assert jnp.allclose(y2, _mish_ref(x2), atol=1e-3, rtol=1e-3), "mismatch (ragged)"

    # Tiny, fully sub-lane count -> pure jnp fallback.
    x2b = jax.random.normal(jax.random.PRNGKey(3), (3, 5, 7), dtype=jnp.float32) * 3.0
    y2b = jax.block_until_ready(mish(x2b))
    assert jnp.allclose(y2b, _mish_ref(x2b), atol=1e-3, rtol=1e-3), "mismatch (tiny)"

    # Multi-step grid with a ragged edge block (rows=25, block_rows=8, grid=4).
    x3 = jax.random.normal(jax.random.PRNGKey(2), (2, 4, 20, 20), dtype=jnp.float32) * 3.0
    y3 = jax.block_until_ready(mish(x3, target_tile_bytes=8 * 128 * 4))
    assert y3.shape == x3.shape and y3.dtype == x3.dtype
    assert jnp.allclose(y3, _mish_ref(x3), atol=1e-3, rtol=1e-3), "mismatch (edge block)"

    # bf16 path: 16-row sublane rounding, Newton step dropped.
    x4 = (jax.random.normal(jax.random.PRNGKey(4), (2, 8, 32, 32)) * 3.0).astype(jnp.bfloat16)
    y4 = jax.block_until_ready(mish(x4))
    assert y4.shape == x4.shape and y4.dtype == x4.dtype
    assert jnp.allclose(y4.astype(jnp.float32), _mish_ref(x4).astype(jnp.float32),
                        atol=2e-2, rtol=2e-2), "mismatch (bf16)"

    print("KERNEL_OK")
</pallas_src>

<mosaic_0001>
module attributes {stable_mosaic.version = 11 : i64} {
  func.func @_mish_kernel(%arg0: i32, %arg1: memref<1x2048xf32, #tpu.memory_space<vmem>>, %arg2: memref<1x2048xf32, #tpu.memory_space<vmem>>) attributes {dimension_semantics = [#tpu.dimension_semantics<parallel>], iteration_bounds = array<i64: 1>, scalar_prefetch = 0 : i64, scratch_operands = 0 : i64, tpu.core_type = #tpu.core_type<tc>, window_params = [{transform_indices = @transform_0, window_bounds = array<i64: 1, 2048>}, {transform_indices = @transform_1, window_bounds = array<i64: 1, 2048>}]} {
    %c0 = arith.constant 0 : index
    %c0_0 = arith.constant 0 : index
    %0 = vector.load %arg1[%c0, %c0_0] : memref<1x2048xf32, #tpu.memory_space<vmem>>, vector<1x2048xf32>
    %cst = arith.constant 2.000000e+01 : f32
    %1 = vector.broadcast %cst : f32 to vector<1x2048xf32>
    %2 = arith.minimumf %0, %1 : vector<1x2048xf32>
    %3 = math.exp %2 : vector<1x2048xf32>
    %cst_1 = arith.constant 2.000000e+00 : f32
    %4 = vector.broadcast %cst_1 : f32 to vector<1x2048xf32>
    %5 = arith.addf %3, %4 : vector<1x2048xf32>
    %6 = arith.mulf %3, %5 : vector<1x2048xf32>
    %cst_2 = arith.constant 2.000000e+00 : f32
    %7 = vector.broadcast %cst_2 : f32 to vector<1x2048xf32>
    %8 = arith.addf %6, %7 : vector<1x2048xf32>
    %9 = tpu.reciprocal %8 {approx = true} : vector<1x2048xf32> -> vector<1x2048xf32>
    %10 = arith.mulf %8, %9 : vector<1x2048xf32>
    %cst_3 = arith.constant 2.000000e+00 : f32
    %11 = vector.broadcast %cst_3 : f32 to vector<1x2048xf32>
    %12 = arith.subf %11, %10 : vector<1x2048xf32>
    %13 = arith.mulf %9, %12 : vector<1x2048xf32>
    %cst_4 = arith.constant 2.000000e+01 : f32
    %14 = vector.broadcast %cst_4 : f32 to vector<1x2048xf32>
    %15 = arith.cmpf ogt, %0, %14 : vector<1x2048xf32>
    %16 = arith.mulf %6, %13 : vector<1x2048xf32>
    %17 = arith.mulf %0, %16 : vector<1x2048xf32>
    %18 = arith.select %15, %0, %17 : vector<1x2048xi1>, vector<1x2048xf32>
    %c0_5 = arith.constant 0 : index
    %c0_6 = arith.constant 0 : index
    %19 = vector.load %arg2[%c0_5, %c0_6] : memref<1x2048xf32, #tpu.memory_space<vmem>>, vector<1x2048xf32>
    tpu.vector_store %arg2[%c0_5, %c0_6], %18 {strides = array<i32>} : memref<1x2048xf32, #tpu.memory_space<vmem>>, vector<1x2048xf32>,
    return
  }
  func.func @transform_0(%arg0: i32) -> (i32, i32) {
    %c0_i32 = arith.constant 0 : i32
    %c0_i32_0 = arith.constant 0 : i32
    return %arg0, %c0_i32 : i32, i32
  }
  func.func @transform_1(%arg0: i32) -> (i32, i32) {
    %c0_i32 = arith.constant 0 : i32
    %c0_i32_0 = arith.constant 0 : i32
    return %arg0, %c0_i32 : i32, i32
  }
}

</mosaic_0001>

<llo_original>
// kernel: tpu_custom_call.1
$region0: #{tpu_custom_call.1}
  #allocation0 [shape = 'u32[]', space=smem, size = 0x4, offset = 0x4, fixed_abs, tag = 'smem constant byte address 0x4 - core index']
  #allocation1 [shape = 'u32[144,128]{1,0:T(1,128)}', space=vmem, size = 0x12000, scoped, tag = 'internal scratch']
  %s0 = inlined_call_operand.hbm [shape: f32[1,2048], index: 0, kind: input, shape index: {}]
  %s1 = inlined_call_operand.hbm [shape: f32[1,2048], index: 1, kind: output, shape index: {}]
  %s2 = sld [smem:[#allocation0]]
  $region18: #{tpu_custom_call.1} parent=0
    _
  %s4 = ssub.s32 1, %s2
  %s5 = scalar_select 0, %s4, %s2
  $region1: #{tpu_custom_call.1} parent=0
    #allocation2 [shape = 'u8[8192]{0}', space=vmem, size = 0x2000, scoped, tag = 'input window, operand 0, single buffered']
    #allocation3 [shape = 's32[1]{0}', space=sflag, size = 0x4, scoped, tag = 'scoped memory for tpu_custom_call.1']
    #allocation4 [shape = 's32[1]{0}', space=sflag, size = 0x4, scoped, tag = 'scoped memory for tpu_custom_call.1']
    #allocation5 [shape = 'u8[8192]{0}', space=vmem, size = 0x2000, scoped, tag = 'output window, operand 0, single buffered']
    %6 = vsyncpa [#allocation3], 0
    %7 = vsyncpa [#allocation4], 0
    // Predicated region
    $region2: #{tpu_custom_call.1} parent=1 // pred_check
      _
    $region3: #{tpu_custom_call.1} parent=1 // pred_check_branch
      %9 = sbr.rel (0) target = $region5
    $region4: #{tpu_custom_call.1} parent=1 // pred_region
      %s11 = ssub.s32 256, 256
      %12 = vsyncadd [#allocation3], %s11
      %s14 = sshll.u32 [#allocation2], 4
      %s15 = int_to_ptr.vmem [resolvable:$true] %s14
      %17 = dma.hbm_to_vmem [thread:$0]  %s0, 256, %s15, [#allocation3]
    $region5: #{tpu_custom_call.1} parent=1 // pred_fallthru
      _
    // Predicated region
    $region6: #{tpu_custom_call.1} parent=1 // pred_check
      _
    $region7: #{tpu_custom_call.1} parent=1 // pred_check_branch
      %19 = sbr.rel (0) target = $region9
    $region8: #{tpu_custom_call.1} parent=1 // pred_region
      %20 = dma.done [#allocation3], 256
    $region9: #{tpu_custom_call.1} parent=1 // pred_fallthru
      _
    %v21 = vld [vmem:[#allocation2] sm:$0xff]
    %v22 = vld [vmem:[#allocation2 + $0x8] sm:$0xff]
    %v23 = vmin.f32 %v21, 20.0
    %v24 = vmin.f32 %v22, 20.0
    %v25 = vmul.f32 %v23, 1.442695
    %v26 = vpow.pop %v25
    %v27 = vmul.f32 %v24, 1.442695
    %v28 = vpow.pop %v27
    %v29 = vadd.f32 %v26, 2.0
    %v30 = vadd.f32 %v28, 2.0
    %v31 = vmul.f32 %v26, %v29
    %v32 = vmul.f32 %v28, %v30
    %v33 = vadd.f32 %v31, 2.0
    %v34 = vadd.f32 %v32, 2.0
    %v35 = vrcp.pop %v33
    %v36 = vrcp.pop %v34
    %v37 = vmul.f32 %v33, %v35
    %v38 = vmul.f32 %v34, %v36
    %v39 = vsub.f32 2.0, %v37
    %v40 = vsub.f32 2.0, %v38
    %v41 = vmul.f32 %v35, %v39
    %v42 = vmul.f32 %v36, %v40
    %vm43 = vcmp.gt.f32.partialorder %v21, 20.0
    %vm44 = vcmp.gt.f32.partialorder %v22, 20.0
    %v45 = vmul.f32 %v31, %v41
    %v46 = vmul.f32 %v32, %v42
    %v47 = vmul.f32 %v21, %v45
    %v48 = vmul.f32 %v22, %v46
    %v49 = vsel %vm43, %v21, %v47
    %v50 = vsel %vm44, %v22, %v48
    %51 = vst [vmem:[#allocation5] sm:$0xff] %v49
    %52 = vst [vmem:[#allocation5 + $0x8] sm:$0xff] %v50
    // Predicated region
    $region10: #{tpu_custom_call.1} parent=1 // pred_check
      _
    $region11: #{tpu_custom_call.1} parent=1 // pred_check_branch
      %54 = sbr.rel (0) target = $region13
    $region12: #{tpu_custom_call.1} parent=1 // pred_region
      %s56 = ssub.s32 256, 256
      %57 = vsyncadd [#allocation4], %s56
      %s59 = sshll.u32 [#allocation5], 4
      %s60 = int_to_ptr.vmem [resolvable:$true] %s59
      %62 = dma.vmem_to_hbm [thread:$0]  %s60, 256, %s1, [#allocation4]
    $region13: #{tpu_custom_call.1} parent=1 // pred_fallthru
      _
    // Predicated region
    $region14: #{tpu_custom_call.1} parent=1 // pred_check
      _
    $region15: #{tpu_custom_call.1} parent=1 // pred_check_branch
      %64 = sbr.rel (0) target = $region17
    $region16: #{tpu_custom_call.1} parent=1 // pred_region
      %65 = dma.done [#allocation4], 256
    $region17: #{tpu_custom_call.1} parent=1 // pred_fallthru
      _
    %66 = vsyncpa [#allocation3], 1
    %67 = vsyncpa [#allocation4], 1

</llo_original>
